<compile_context>
chip_gen: v5e
topology: v5e:2x2
jax: 0.10.0
libtpu: 0.0.40
codegen_flags: <defaults>
</compile_context>

<pallas_src>
import functools

import jax
import jax.numpy as jnp
from jax.experimental import pallas as pl
from jax.experimental.pallas import tpu as pltpu


def _mha_head_kernel(x_ref, wq_ref, wk_ref, wv_ref, wp_ref, bproj_ref,
                     o_ref, acc_ref, *, num_heads):
    """One (batch, head) grid point.

    refs: x (1, T, C) bf16, wq/wk/wv (1, C, Dh) bf16 (scale folded into wq),
          wp (1, Dh, C) bf16, bproj (1, C) f32, o (1, T, C) f32,
          acc scratch (T, C) f32 (resident across the head axis).
    """
    h = pl.program_id(1)

    @pl.when(h == 0)
    def _():
        acc_ref[...] = jnp.zeros_like(acc_ref)

    x = x_ref[0]                                   # (T, C) bf16
    t = x.shape[0]

    # Per-head projections: bf16 MXU inputs, f32 accumulation.
    q = jnp.dot(x, wq_ref[0], preferred_element_type=jnp.float32)   # (T, Dh)
    k = jnp.dot(x, wk_ref[0], preferred_element_type=jnp.float32)   # (T, Dh)
    v = jnp.dot(x, wv_ref[0], preferred_element_type=jnp.float32)   # (T, Dh)

    # q @ k^T without an explicit transpose: contract the last axes.
    s = jax.lax.dot_general(
        q.astype(jnp.bfloat16), k.astype(jnp.bfloat16),
        (((1,), (1,)), ((), ())),
        preferred_element_type=jnp.float32)                          # (T, T)

    # Causal mask + numerically-stable softmax, all in f32.
    row = jax.lax.broadcasted_iota(jnp.int32, (t, t), 0)
    col = jax.lax.broadcasted_iota(jnp.int32, (t, t), 1)
    s = jnp.where(col <= row, s, -jnp.inf)          # masked_fill(tril==0,-inf)
    s = s - jnp.max(s, axis=-1, keepdims=True)
    p = jnp.exp(s)
    p = p * pl.reciprocal(jnp.sum(p, axis=-1, keepdims=True), approx=True)
    # TODO(synk): attention dropout omitted (inference semantics / p = 0.0).

    attn = jnp.dot(p.astype(jnp.bfloat16), v.astype(jnp.bfloat16),
                   preferred_element_type=jnp.float32)               # (T, Dh)

    # Per-head slice of the output projection, accumulated across heads:
    #   concat(heads) @ Wp == sum_h head_h @ Wp[h*Dh:(h+1)*Dh, :]
    acc_ref[...] += jnp.dot(attn.astype(jnp.bfloat16), wp_ref[0],
                            preferred_element_type=jnp.float32)      # (T, C)

    @pl.when(h == num_heads - 1)
    def _():
        o_ref[0] = (acc_ref[...] + bproj_ref[...]).astype(o_ref.dtype)
        # TODO(synk): output dropout omitted (inference semantics / p = 0.0).


def multi_head_attention(x, wq, wk, wv, w_proj, b_proj):
    """x: (B, T, C); wq/wk/wv: (H, C, Dh); w_proj: (H*Dh, C); b_proj: (1, C)."""
    B, T, C = x.shape
    H, _, Dh = wq.shape

    # Fold the attention scale into the Q weights (once, outside the kernel),
    # and cast all MXU operands to bf16.  Bias stays f32 (added to f32 acc).
    scale = float(Dh) ** -0.5
    x_b = x.astype(jnp.bfloat16)
    wq_b = (wq * scale).astype(jnp.bfloat16)
    wk_b = wk.astype(jnp.bfloat16)
    wv_b = wv.astype(jnp.bfloat16)
    wp_b = w_proj.reshape(H, Dh, C).astype(jnp.bfloat16)
    bproj_f = b_proj.astype(jnp.float32)

    kernel = functools.partial(_mha_head_kernel, num_heads=H)

    flops = B * H * (3 * 2 * T * C * Dh      # qkv projections
                     + 2 * 2 * T * T * Dh    # qk^T + pv
                     + 2 * T * Dh * C)       # per-head out-proj partial
    transcendentals = B * H * T * T          # exp over scores
    bytes_accessed = (x_b.size * 2
                      + (wq_b.size + wk_b.size + wv_b.size + wp_b.size) * 2
                      + bproj_f.size * 4
                      + B * T * C * 4)

    return pl.pallas_call(
        kernel,
        out_shape=jax.ShapeDtypeStruct((B, T, C), jnp.float32),
        grid=(B, H),
        in_specs=[
            # x: constant block index across h -> DMA'd once per batch step.
            pl.BlockSpec((1, T, C), lambda b, h: (b, 0, 0)),
            # Per-head weight tiles streamed by the head grid axis.
            pl.BlockSpec((1, C, Dh), lambda b, h: (h, 0, 0)),
            pl.BlockSpec((1, C, Dh), lambda b, h: (h, 0, 0)),
            pl.BlockSpec((1, C, Dh), lambda b, h: (h, 0, 0)),
            pl.BlockSpec((1, Dh, C), lambda b, h: (h, 0, 0)),
            pl.BlockSpec((1, C), lambda b, h: (0, 0)),
        ],
        # Same output block across the head (reduction) axis -> accumulator.
        out_specs=pl.BlockSpec((1, T, C), lambda b, h: (b, 0, 0)),
        scratch_shapes=[pltpu.VMEM((T, C), jnp.float32)],
        compiler_params=pltpu.CompilerParams(
            dimension_semantics=("parallel", "arbitrary"),
            vmem_limit_bytes=32 * 1024 * 1024),
        cost_estimate=pl.CostEstimate(
            flops=flops,
            transcendentals=transcendentals,
            bytes_accessed=bytes_accessed),
    )(x_b, wq_b, wk_b, wv_b, wp_b, bproj_f)


def _reference(x, wq, wk, wv, w_proj, b_proj):
    """Pure-JAX f32 reference mirroring the PyTorch forward (dropout = id)."""
    B, T, C = x.shape
    H, _, Dh = wq.shape
    q = jnp.einsum("btc,hcd->bhtd", x, wq)
    k = jnp.einsum("btc,hcd->bhtd", x, wk)
    v = jnp.einsum("btc,hcd->bhtd", x, wv)
    wei = jnp.einsum("bhtd,bhsd->bhts", q, k) * (Dh ** -0.5)
    mask = jnp.tril(jnp.ones((T, T), dtype=bool))
    wei = jnp.where(mask[None, None], wei, -jnp.inf)
    wei = jax.nn.softmax(wei, axis=-1)
    o = jnp.einsum("bhts,bhsd->bhtd", wei, v)
    o = o.transpose(0, 2, 1, 3).reshape(B, T, H * Dh)
    return o @ w_proj + b_proj[0]


if __name__ == "__main__":
    # Module hyperparameters (small, consistent with the forward pass).
    B = 2              # batch
    T = 8              # sequence length == block_size
    n_embd = 32        # C
    num_heads = 4      # H
    head_size = 8      # Dh  (H * Dh == n_embd)
    # dropout = 0.0 -> identity (inference semantics).

    key = jax.random.PRNGKey(0)
    kx, kq, kk, kv, kw, kb = jax.random.split(key, 6)

    x = jax.random.normal(kx, (B, T, n_embd), dtype=jnp.float32)
    # Deterministic parameter init (synthetic weights, PyTorch-like scale).
    scale_in = (1.0 / n_embd) ** 0.5
    wq = jax.random.uniform(kq, (num_heads, n_embd, head_size),
                            minval=-scale_in, maxval=scale_in, dtype=jnp.float32)
    wk = jax.random.uniform(kk, (num_heads, n_embd, head_size),
                            minval=-scale_in, maxval=scale_in, dtype=jnp.float32)
    wv = jax.random.uniform(kv, (num_heads, n_embd, head_size),
                            minval=-scale_in, maxval=scale_in, dtype=jnp.float32)
    scale_proj = (1.0 / (num_heads * head_size)) ** 0.5
    w_proj = jax.random.uniform(kw, (num_heads * head_size, n_embd),
                                minval=-scale_proj, maxval=scale_proj,
                                dtype=jnp.float32)
    b_proj = jax.random.uniform(kb, (1, n_embd),
                                minval=-scale_proj, maxval=scale_proj,
                                dtype=jnp.float32)

    out = multi_head_attention(x, wq, wk, wv, w_proj, b_proj)
    out = jax.block_until_ready(out)

    ref = _reference(x, wq, wk, wv, w_proj, b_proj)
    assert out.shape == (B, T, n_embd)
    # Tolerance accounts for bf16 MXU operands and the EUP approximate
    # reciprocal in the softmax denominator (reference is pure f32).
    assert jnp.allclose(out, ref, atol=3e-2, rtol=3e-2), "mismatch vs reference"

    print("KERNEL_OK")
</pallas_src>

<mosaic_0001>
module attributes {stable_mosaic.version = 11 : i64} {
  func.func @_mha_head_kernel(%arg0: i32, %arg1: i32, %arg2: memref<1x8x32xbf16, #tpu.memory_space<vmem>>, %arg3: memref<1x32x8xbf16, #tpu.memory_space<vmem>>, %arg4: memref<1x32x8xbf16, #tpu.memory_space<vmem>>, %arg5: memref<1x32x8xbf16, #tpu.memory_space<vmem>>, %arg6: memref<1x8x32xbf16, #tpu.memory_space<vmem>>, %arg7: memref<1x32xf32, #tpu.memory_space<vmem>>, %arg8: memref<1x8x32xf32, #tpu.memory_space<vmem>>, %arg9: memref<8x32xf32, #tpu.memory_space<vmem>>) attributes {dimension_semantics = [#tpu.dimension_semantics<parallel>, #tpu.dimension_semantics<arbitrary>], iteration_bounds = array<i64: 2, 4>, scalar_prefetch = 0 : i64, scratch_operands = 1 : i64, tpu.core_type = #tpu.core_type<tc>, window_params = [{transform_indices = @transform_0, window_bounds = array<i64: 1, 8, 32>}, {transform_indices = @transform_1, window_bounds = array<i64: 1, 32, 8>}, {transform_indices = @transform_2, window_bounds = array<i64: 1, 32, 8>}, {transform_indices = @transform_3, window_bounds = array<i64: 1, 32, 8>}, {transform_indices = @transform_4, window_bounds = array<i64: 1, 8, 32>}, {pipeline_mode = #tpu.pipeline_mode<synchronous>, transform_indices = @transform_5, window_bounds = array<i64: 1, 32>}, {transform_indices = @transform_6, window_bounds = array<i64: 1, 8, 32>}]} {
    %c0_i32 = arith.constant 0 : i32
    %0 = arith.cmpi eq, %arg1, %c0_i32 : i32
    %1 = arith.extui %0 : i1 to i32
    %c0_i32_0 = arith.constant 0 : i32
    %2 = arith.cmpi ne, %1, %c0_i32_0 : i32
    scf.if %2 {
      %cst_28 = arith.constant 0.000000e+00 : f32
      %45 = vector.broadcast %cst_28 : f32 to vector<8x32xf32>
      %c0_29 = arith.constant 0 : index
      %c0_30 = arith.constant 0 : index
      %46 = vector.load %arg9[%c0_29, %c0_30] : memref<8x32xf32, #tpu.memory_space<vmem>>, vector<8x32xf32>
      tpu.vector_store %arg9[%c0_29, %c0_30], %45 {strides = array<i32>} : memref<8x32xf32, #tpu.memory_space<vmem>>, vector<8x32xf32>,
    } else {
    }
    %c0 = arith.constant 0 : index
    %c0_1 = arith.constant 0 : index
    %c0_2 = arith.constant 0 : index
    %3 = vector.load %arg2[%c0, %c0_1, %c0_2] : memref<1x8x32xbf16, #tpu.memory_space<vmem>>, vector<1x8x32xbf16>
    %4 = vector.shape_cast %3 : vector<1x8x32xbf16> to vector<8x32xbf16>
    %c0_3 = arith.constant 0 : index
    %c0_4 = arith.constant 0 : index
    %c0_5 = arith.constant 0 : index
    %5 = vector.load %arg3[%c0_3, %c0_4, %c0_5] : memref<1x32x8xbf16, #tpu.memory_space<vmem>>, vector<1x32x8xbf16>
    %6 = vector.shape_cast %5 : vector<1x32x8xbf16> to vector<32x8xbf16>
    %cst = arith.constant dense<0.000000e+00> : vector<8x8xf32>
    %7 = tpu.matmul %4, %6, %cst {dimension_numbers = #tpu.dot_dimension_numbers<[1], [0], [0], [1], [0, 0, 1, 1], [], []>} : vector<8x32xbf16>, vector<32x8xbf16>, vector<8x8xf32> -> vector<8x8xf32>
    %c0_6 = arith.constant 0 : index
    %c0_7 = arith.constant 0 : index
    %c0_8 = arith.constant 0 : index
    %8 = vector.load %arg4[%c0_6, %c0_7, %c0_8] : memref<1x32x8xbf16, #tpu.memory_space<vmem>>, vector<1x32x8xbf16>
    %9 = vector.shape_cast %8 : vector<1x32x8xbf16> to vector<32x8xbf16>
    %cst_9 = arith.constant dense<0.000000e+00> : vector<8x8xf32>
    %10 = tpu.matmul %4, %9, %cst_9 {dimension_numbers = #tpu.dot_dimension_numbers<[1], [0], [0], [1], [0, 0, 1, 1], [], []>} : vector<8x32xbf16>, vector<32x8xbf16>, vector<8x8xf32> -> vector<8x8xf32>
    %c0_10 = arith.constant 0 : index
    %c0_11 = arith.constant 0 : index
    %c0_12 = arith.constant 0 : index
    %11 = vector.load %arg5[%c0_10, %c0_11, %c0_12] : memref<1x32x8xbf16, #tpu.memory_space<vmem>>, vector<1x32x8xbf16>
    %12 = vector.shape_cast %11 : vector<1x32x8xbf16> to vector<32x8xbf16>
    %cst_13 = arith.constant dense<0.000000e+00> : vector<8x8xf32>
    %13 = tpu.matmul %4, %12, %cst_13 {dimension_numbers = #tpu.dot_dimension_numbers<[1], [0], [0], [1], [0, 0, 1, 1], [], []>} : vector<8x32xbf16>, vector<32x8xbf16>, vector<8x8xf32> -> vector<8x8xf32>
    %14 = arith.truncf %7 : vector<8x8xf32> to vector<8x8xbf16>
    %15 = arith.truncf %10 : vector<8x8xf32> to vector<8x8xbf16>
    %cst_14 = arith.constant dense<0.000000e+00> : vector<8x8xf32>
    %16 = tpu.matmul %14, %15, %cst_14 {dimension_numbers = #tpu.dot_dimension_numbers<[1], [1], [0], [0], [0, 0, 1, 0], [], []>} : vector<8x8xbf16>, vector<8x8xbf16>, vector<8x8xf32> -> vector<8x8xf32>
    %17 = tpu.iota {dimensions = array<i32: 0>} : vector<8x8xi32>
    %18 = tpu.iota {dimensions = array<i32: 1>} : vector<8x8xi32>
    %19 = arith.cmpi sle, %18, %17 : vector<8x8xi32>
    %cst_15 = arith.constant 0xFF800000 : f32
    %20 = vector.broadcast %cst_15 : f32 to vector<8x8xf32>
    %21 = arith.select %19, %16, %20 : vector<8x8xi1>, vector<8x8xf32>
    %cst_16 = arith.constant dense<0xFF800000> : vector<8xf32>
    %22 = vector.multi_reduction <maximumf>, %21, %cst_16 [1] : vector<8x8xf32> to vector<8xf32>
    %23 = vector.shape_cast %22 : vector<8xf32> to vector<8x1xf32>
    %24 = vector.broadcast %23 : vector<8x1xf32> to vector<8x8xf32>
    %25 = arith.subf %21, %24 : vector<8x8xf32>
    %26 = math.exp %25 : vector<8x8xf32>
    %cst_17 = arith.constant dense<0.000000e+00> : vector<8xf32>
    %27 = vector.multi_reduction <add>, %26, %cst_17 [1] : vector<8x8xf32> to vector<8xf32>
    %28 = vector.shape_cast %27 : vector<8xf32> to vector<8x1xf32>
    %29 = tpu.reciprocal %28 {approx = true} : vector<8x1xf32> -> vector<8x1xf32>
    %30 = vector.broadcast %29 : vector<8x1xf32> to vector<8x8xf32>
    %31 = arith.mulf %26, %30 : vector<8x8xf32>
    %32 = arith.truncf %31 : vector<8x8xf32> to vector<8x8xbf16>
    %33 = arith.truncf %13 : vector<8x8xf32> to vector<8x8xbf16>
    %cst_18 = arith.constant dense<0.000000e+00> : vector<8x8xf32>
    %34 = tpu.matmul %32, %33, %cst_18 {dimension_numbers = #tpu.dot_dimension_numbers<[1], [0], [0], [1], [0, 0, 1, 1], [], []>} : vector<8x8xbf16>, vector<8x8xbf16>, vector<8x8xf32> -> vector<8x8xf32>
    %c0_19 = arith.constant 0 : index
    %c0_20 = arith.constant 0 : index
    %35 = vector.load %arg9[%c0_19, %c0_20] : memref<8x32xf32, #tpu.memory_space<vmem>>, vector<8x32xf32>
    %36 = arith.truncf %34 : vector<8x8xf32> to vector<8x8xbf16>
    %c0_21 = arith.constant 0 : index
    %c0_22 = arith.constant 0 : index
    %c0_23 = arith.constant 0 : index
    %37 = vector.load %arg6[%c0_21, %c0_22, %c0_23] : memref<1x8x32xbf16, #tpu.memory_space<vmem>>, vector<1x8x32xbf16>
    %38 = vector.shape_cast %37 : vector<1x8x32xbf16> to vector<8x32xbf16>
    %cst_24 = arith.constant dense<0.000000e+00> : vector<8x32xf32>
    %39 = tpu.matmul %36, %38, %cst_24 {dimension_numbers = #tpu.dot_dimension_numbers<[1], [0], [0], [1], [0, 0, 1, 1], [], []>} : vector<8x8xbf16>, vector<8x32xbf16>, vector<8x32xf32> -> vector<8x32xf32>
    %40 = arith.addf %35, %39 : vector<8x32xf32>
    %c0_25 = arith.constant 0 : index
    %c0_26 = arith.constant 0 : index
    %41 = vector.load %arg9[%c0_25, %c0_26] : memref<8x32xf32, #tpu.memory_space<vmem>>, vector<8x32xf32>
    tpu.vector_store %arg9[%c0_25, %c0_26], %40 {strides = array<i32>} : memref<8x32xf32, #tpu.memory_space<vmem>>, vector<8x32xf32>,
    %c3_i32 = arith.constant 3 : i32
    %42 = arith.cmpi eq, %arg1, %c3_i32 : i32
    %43 = arith.extui %42 : i1 to i32
    %c0_i32_27 = arith.constant 0 : i32
    %44 = arith.cmpi ne, %43, %c0_i32_27 : i32
    scf.if %44 {
      %c0_28 = arith.constant 0 : index
      %c0_29 = arith.constant 0 : index
      %45 = vector.load %arg9[%c0_28, %c0_29] : memref<8x32xf32, #tpu.memory_space<vmem>>, vector<8x32xf32>
      %c0_30 = arith.constant 0 : index
      %c0_31 = arith.constant 0 : index
      %46 = vector.load %arg7[%c0_30, %c0_31] : memref<1x32xf32, #tpu.memory_space<vmem>>, vector<1x32xf32>
      %47 = vector.broadcast %46 : vector<1x32xf32> to vector<8x32xf32>
      %48 = arith.addf %45, %47 : vector<8x32xf32>
      %c0_32 = arith.constant 0 : index
      %c0_33 = arith.constant 0 : index
      %c0_34 = arith.constant 0 : index
      %49 = vector.load %arg8[%c0_32, %c0_33, %c0_34] : memref<1x8x32xf32, #tpu.memory_space<vmem>>, vector<1x8x32xf32>
      %50 = vector.shape_cast %49 : vector<1x8x32xf32> to vector<8x32xf32>
      %51 = vector.shape_cast %48 : vector<8x32xf32> to vector<1x8x32xf32>
      tpu.vector_store %arg8[%c0_32, %c0_33, %c0_34], %51 {strides = array<i32>} : memref<1x8x32xf32, #tpu.memory_space<vmem>>, vector<1x8x32xf32>,
    } else {
    }
    return
  }
  func.func @transform_0(%arg0: i32, %arg1: i32) -> (i32, i32, i32) {
    %c0_i32 = arith.constant 0 : i32
    %c0_i32_0 = arith.constant 0 : i32
    %c0_i32_1 = arith.constant 0 : i32
    return %arg0, %c0_i32, %c0_i32_0 : i32, i32, i32
  }
  func.func @transform_1(%arg0: i32, %arg1: i32) -> (i32, i32, i32) {
    %c0_i32 = arith.constant 0 : i32
    %c0_i32_0 = arith.constant 0 : i32
    %c0_i32_1 = arith.constant 0 : i32
    return %arg1, %c0_i32, %c0_i32_0 : i32, i32, i32
  }
  func.func @transform_2(%arg0: i32, %arg1: i32) -> (i32, i32, i32) {
    %c0_i32 = arith.constant 0 : i32
    %c0_i32_0 = arith.constant 0 : i32
    %c0_i32_1 = arith.constant 0 : i32
    return %arg1, %c0_i32, %c0_i32_0 : i32, i32, i32
  }
  func.func @transform_3(%arg0: i32, %arg1: i32) -> (i32, i32, i32) {
    %c0_i32 = arith.constant 0 : i32
    %c0_i32_0 = arith.constant 0 : i32
    %c0_i32_1 = arith.constant 0 : i32
    return %arg1, %c0_i32, %c0_i32_0 : i32, i32, i32
  }
  func.func @transform_4(%arg0: i32, %arg1: i32) -> (i32, i32, i32) {
    %c0_i32 = arith.constant 0 : i32
    %c0_i32_0 = arith.constant 0 : i32
    %c0_i32_1 = arith.constant 0 : i32
    return %arg1, %c0_i32, %c0_i32_0 : i32, i32, i32
  }
  func.func @transform_5(%arg0: i32, %arg1: i32) -> (i32, i32) {
    %c0_i32 = arith.constant 0 : i32
    %c0_i32_0 = arith.constant 0 : i32
    %c0_i32_1 = arith.constant 0 : i32
    return %c0_i32, %c0_i32_0 : i32, i32
  }
  func.func @transform_6(%arg0: i32, %arg1: i32) -> (i32, i32, i32) {
    %c0_i32 = arith.constant 0 : i32
    %c0_i32_0 = arith.constant 0 : i32
    %c0_i32_1 = arith.constant 0 : i32
    return %arg0, %c0_i32, %c0_i32_0 : i32, i32, i32
  }
}

</mosaic_0001>

<llo_original>
// kernel: tpu_custom_call.1
$region0: #{tpu_custom_call.1}
  #allocation0 [shape = 'u32[]', space=smem, size = 0x4, offset = 0x4, fixed_abs, tag = 'smem constant byte address 0x4 - core index']
  #allocation1 [shape = 'u32[72,128]{1,0:T(1,128)}', space=vmem, size = 0x9000, scoped, tag = 'internal scratch']
  #allocation2 [shape = 'f32[8,32]{1,0:T(8,128)}', space=vmem, size = 0x1000, scoped, tag = 'scratch operand']
  %s0 = inlined_call_operand.vmem [shape: bf16[2,8,32], index: 0, kind: input, shape index: {}]
  %s1 = inlined_call_operand.vmem [shape: bf16[4,32,8], index: 1, kind: input, shape index: {}]
  %s2 = inlined_call_operand.vmem [shape: bf16[4,32,8], index: 2, kind: input, shape index: {}]
  %s3 = inlined_call_operand.vmem [shape: bf16[4,32,8], index: 3, kind: input, shape index: {}]
  %s4 = inlined_call_operand.vmem [shape: bf16[4,8,32], index: 4, kind: input, shape index: {}]
  %s5 = inlined_call_operand.vmem [shape: f32[1,32], index: 5, kind: input, shape index: {}]
  %s6 = inlined_call_operand.hbm [shape: f32[2,8,32], index: 6, kind: output, shape index: {}]
  %s7 = sld [smem:[#allocation0]]
  $region65: #{tpu_custom_call.1} parent=0
    _
  %s9 = ssub.s32 1, %s7
  %s10 = scalar_select 0, %s9, %s7
  $region1: #{tpu_custom_call.1} parent=0
    #allocation3 [shape = 'u8[8192]{0}', space=vmem, size = 0x2000, scoped, tag = 'output window, operand 0']
    #allocation4 [shape = 's32[2]{0}', space=sflag, size = 0x8, scoped, tag = 'scoped memory for tpu_custom_call.1']
    %11 = vsyncpa [#allocation4], 0
    %s12 = scalar_lea.sflag [#allocation4], 1
    %13 = vsyncpa %s12, 0
    loop: start=0, step=1, limit=10
    $region2: #{tpu_custom_call.1} parent=1 // loop_pre_header
      _
    $region3: #{tpu_custom_call.1} parent=1 // loop_header
      %s15 = sphi 0, %s19
      %p16 = scmp.ge.s32.totalorder %s15, 10
      %s22 = sphi 0, %s34
      %s23 = sphi 0, %s30
      %s24 = sphi 0, %s22
      %s25 = sphi 0, %s23
      %s26 = sphi 0, %s24
      %s27 = sphi 0, %s25
      %s37 = sphi 0, %s39
      %s40 = sphi 0, %s37
      %s41 = sphi 0, %s40
      %s57 = sphi 0, %s41
      %s63 = sphi 0, %s65
      %s66 = sphi 0, %s63
      %s67 = sphi 0, %s66
      %s83 = sphi 0, %s67
      %s89 = sphi 0, %s91
      %s92 = sphi 0, %s89
      %s93 = sphi 0, %s92
      %s109 = sphi 0, %s93
      %s115 = sphi 0, %s117
      %s118 = sphi 0, %s115
      %s119 = sphi 0, %s118
      %s135 = sphi 0, %s119
      %s141 = sphi 0, %s143
      %s144 = sphi 0, %s141
      %s145 = sphi 0, %s144
      %s161 = sphi 0, %s145
      %s165 = sphi 0, %s165
      %s167 = sphi 0, %s165
      %s168 = sphi 0, %s167
      %s182 = sphi 0, %s168
      %s188 = sphi 0, %s190
      %s191 = sphi 0, %s188
      %s192 = sphi 0, %s191
      %s208 = sphi 0, %s192
    $region4: #{tpu_custom_call.1} parent=1 // loop_header_branch
      %18 = sbr.rel (%p16) target = $region8
    $region5: #{tpu_custom_call.1} parent=1 // loop_body
      %s20 = ssub.s32 %s15, 1
      %s21 = ssub.s32 %s15, 2
      %s28 = sadd.s32 1, %s23
      %p29 = scmp.ge.s32.totalorder %s28, 4
      %s30 = scalar_select %p29, 0, %s28
      %s31 = sadd.s32 1, %s22
      %s32 = scalar_select %p29, %s31, %s22
      %p33 = scmp.ge.s32.totalorder %s32, 2
      %s34 = scalar_select %p33, 0, %s32
      %s35 = ssub.s32 %s22, %s34
      %p36 = scmp.eq.s32.totalorder %s35, 0
      %s38 = sadd.s32 %s37, 1
      %s39 = scalar_select %p36, %s37, %s38
      %p42 = pneg %p36
      %p43 = scmp.eq.s32.totalorder %s15, 7
      %p44 = por %p42, %p43
      %p45 = scmp.ne.s32.totalorder %s37, %s40
      %p46 = scmp.eq.s32.totalorder %s15, 0
      %p47 = por %p45, %p46
      %p48 = scmp.ne.s32.totalorder %s37, %s40
      %p49 = scmp.eq.s32.totalorder %s20, 7
      %p50 = por %p48, %p49
      %p51 = scmp.ne.s32.totalorder %s40, %s41
      %p52 = scmp.eq.s32.totalorder %s20, 0
      %p53 = por %p51, %p52
      %p54 = scmp.ne.s32.totalorder %s40, %s41
      %p55 = scmp.eq.s32.totalorder %s21, 7
      %p56 = por %p54, %p55
      %p58 = scmp.ne.s32.totalorder %s41, %s57
      %p59 = scmp.eq.s32.totalorder %s21, 0
      %p60 = por %p58, %p59
      %s61 = ssub.s32 %s23, %s30
      %p62 = scmp.eq.s32.totalorder %s61, 0
      %s64 = sadd.s32 %s63, 1
      %s65 = scalar_select %p62, %s63, %s64
      %p68 = pneg %p62
      %p69 = scmp.eq.s32.totalorder %s15, 7
      %p70 = por %p68, %p69
      %p71 = scmp.ne.s32.totalorder %s63, %s66
      %p72 = scmp.eq.s32.totalorder %s15, 0
      %p73 = por %p71, %p72
      %p74 = scmp.ne.s32.totalorder %s63, %s66
      %p75 = scmp.eq.s32.totalorder %s20, 7
      %p76 = por %p74, %p75
      %p77 = scmp.ne.s32.totalorder %s66, %s67
      %p78 = scmp.eq.s32.totalorder %s20, 0
      %p79 = por %p77, %p78
      %p80 = scmp.ne.s32.totalorder %s66, %s67
      %p81 = scmp.eq.s32.totalorder %s21, 7
      %p82 = por %p80, %p81
      %p84 = scmp.ne.s32.totalorder %s67, %s83
      %p85 = scmp.eq.s32.totalorder %s21, 0
      %p86 = por %p84, %p85
      %s87 = ssub.s32 %s23, %s30
      %p88 = scmp.eq.s32.totalorder %s87, 0
      %s90 = sadd.s32 %s89, 1
      %s91 = scalar_select %p88, %s89, %s90
      %p94 = pneg %p88
      %p95 = scmp.eq.s32.totalorder %s15, 7
      %p96 = por %p94, %p95
      %p97 = scmp.ne.s32.totalorder %s89, %s92
      %p98 = scmp.eq.s32.totalorder %s15, 0
      %p99 = por %p97, %p98
      %p100 = scmp.ne.s32.totalorder %s89, %s92
      %p101 = scmp.eq.s32.totalorder %s20, 7
      %p102 = por %p100, %p101
      %p103 = scmp.ne.s32.totalorder %s92, %s93
      %p104 = scmp.eq.s32.totalorder %s20, 0
      %p105 = por %p103, %p104
      %p106 = scmp.ne.s32.totalorder %s92, %s93
      %p107 = scmp.eq.s32.totalorder %s21, 7
      %p108 = por %p106, %p107
      %p110 = scmp.ne.s32.totalorder %s93, %s109
      %p111 = scmp.eq.s32.totalorder %s21, 0
      %p112 = por %p110, %p111
      %s113 = ssub.s32 %s23, %s30
      %p114 = scmp.eq.s32.totalorder %s113, 0
      %s116 = sadd.s32 %s115, 1
      %s117 = scalar_select %p114, %s115, %s116
      %p120 = pneg %p114
      %p121 = scmp.eq.s32.totalorder %s15, 7
      %p122 = por %p120, %p121
      %p123 = scmp.ne.s32.totalorder %s115, %s118
      %p124 = scmp.eq.s32.totalorder %s15, 0
      %p125 = por %p123, %p124
      %p126 = scmp.ne.s32.totalorder %s115, %s118
      %p127 = scmp.eq.s32.totalorder %s20, 7
      %p128 = por %p126, %p127
      %p129 = scmp.ne.s32.totalorder %s118, %s119
      %p130 = scmp.eq.s32.totalorder %s20, 0
      %p131 = por %p129, %p130
      %p132 = scmp.ne.s32.totalorder %s118, %s119
      %p133 = scmp.eq.s32.totalorder %s21, 7
      %p134 = por %p132, %p133
      %p136 = scmp.ne.s32.totalorder %s119, %s135
      %p137 = scmp.eq.s32.totalorder %s21, 0
      %p138 = por %p136, %p137
      %s139 = ssub.s32 %s23, %s30
      %p140 = scmp.eq.s32.totalorder %s139, 0
      %s142 = sadd.s32 %s141, 1
      %s143 = scalar_select %p140, %s141, %s142
      %p146 = pneg %p140
      %p147 = scmp.eq.s32.totalorder %s15, 7
      %p148 = por %p146, %p147
      %p149 = scmp.ne.s32.totalorder %s141, %s144
      %p150 = scmp.eq.s32.totalorder %s15, 0
      %p151 = por %p149, %p150
      %p152 = scmp.ne.s32.totalorder %s141, %s144
      %p153 = scmp.eq.s32.totalorder %s20, 7
      %p154 = por %p152, %p153
      %p155 = scmp.ne.s32.totalorder %s144, %s145
      %p156 = scmp.eq.s32.totalorder %s20, 0
      %p157 = por %p155, %p156
      %p158 = scmp.ne.s32.totalorder %s144, %s145
      %p159 = scmp.eq.s32.totalorder %s21, 7
      %p160 = por %p158, %p159
      %p162 = scmp.ne.s32.totalorder %s145, %s161
      %p163 = scmp.eq.s32.totalorder %s21, 0
      %p164 = por %p162, %p163
      %s166 = sadd.s32 %s165, 1
      %p169 = scmp.eq.s32.totalorder %s15, 7
      %p170 = scmp.ne.s32.totalorder %s165, %s167
      %p171 = scmp.eq.s32.totalorder %s15, 0
      %p172 = por %p170, %p171
      %p173 = scmp.ne.s32.totalorder %s165, %s167
      %p174 = scmp.eq.s32.totalorder %s20, 7
      %p175 = por %p173, %p174
      %p176 = scmp.ne.s32.totalorder %s167, %s168
      %p177 = scmp.eq.s32.totalorder %s20, 0
      %p178 = por %p176, %p177
      %p179 = scmp.ne.s32.totalorder %s167, %s168
      %p180 = scmp.eq.s32.totalorder %s21, 7
      %p181 = por %p179, %p180
      %p183 = scmp.ne.s32.totalorder %s168, %s182
      %p184 = scmp.eq.s32.totalorder %s21, 0
      %p185 = por %p183, %p184
      %s186 = ssub.s32 %s22, %s34
      %p187 = scmp.eq.s32.totalorder %s186, 0
      %s189 = sadd.s32 %s188, 1
      %s190 = scalar_select %p187, %s188, %s189
      %p193 = pneg %p187
      %p194 = scmp.eq.s32.totalorder %s15, 7
      %p195 = por %p193, %p194
      %p196 = scmp.ne.s32.totalorder %s188, %s191
      %p197 = scmp.eq.s32.totalorder %s15, 0
      %p198 = por %p196, %p197
      %p199 = scmp.ne.s32.totalorder %s188, %s191
      %p200 = scmp.eq.s32.totalorder %s20, 7
      %p201 = por %p199, %p200
      %p202 = scmp.ne.s32.totalorder %s191, %s192
      %p203 = scmp.eq.s32.totalorder %s20, 0
      %p204 = por %p202, %p203
      %p205 = scmp.ne.s32.totalorder %s191, %s192
      %p206 = scmp.eq.s32.totalorder %s21, 7
      %p207 = por %p205, %p206
      %p209 = scmp.ne.s32.totalorder %s192, %s208
      %p210 = scmp.eq.s32.totalorder %s21, 0
      %p211 = por %p209, %p210
      %p212 = scmp.le.s32.totalorder 1, %s15
      %p213 = scmp.lt.s32.totalorder %s15, 9
      %p214 = pnand %p212, %p213
      %p215 = pneg %p214
      // Predicated region
      $region9: #{tpu_custom_call.1} parent=5 // pred_check
        _
      $region10: #{tpu_custom_call.1} parent=5 // pred_check_branch
        %217 = sbr.rel (%p214) target = $region12
      $region11: #{tpu_custom_call.1} parent=5 // pred_region
        %s218 = ssub.s32 %s15, 1
        // Predicated region
        $region13: #{tpu_custom_call.1} parent=11 // pred_check
          %p219 = pneg %p178
        $region14: #{tpu_custom_call.1} parent=11 // pred_check_branch
          %221 = sbr.rel (%p219) target = $region16
        $region15: #{tpu_custom_call.1} parent=11 // pred_region
          _
        $region16: #{tpu_custom_call.1} parent=11 // pred_fallthru
          _
      $region12: #{tpu_custom_call.1} parent=5 // pred_fallthru
        _
      %p222 = scmp.lt.s32.totalorder %s15, 8
      // Predicated region
      $region17: #{tpu_custom_call.1} parent=5 // pred_check
        %p223 = pneg %p222
      $region18: #{tpu_custom_call.1} parent=5 // pred_check_branch
        %225 = sbr.rel (%p223) target = $region20
      $region19: #{tpu_custom_call.1} parent=5 // pred_region
        // Predicated region
        $region21: #{tpu_custom_call.1} parent=19 // pred_check
          %p226 = pneg %p47
        $region22: #{tpu_custom_call.1} parent=19 // pred_check_branch
          %228 = sbr.rel (%p226) target = $region24
        $region23: #{tpu_custom_call.1} parent=19 // pred_region
          %p229 = scmp.lt.s32.totalorder %s22, 1
          %s230 = scalar_select %p229, %s22, 1
          %s231 = smul.addr %s230, 4
          %s232 = scalar_lea.vmem %s0, %s231
        $region24: #{tpu_custom_call.1} parent=19 // pred_fallthru
          _
        // Predicated region
        $region25: #{tpu_custom_call.1} parent=19 // pred_check
          %p233 = pneg %p73
        $region26: #{tpu_custom_call.1} parent=19 // pred_check_branch
          %235 = sbr.rel (%p233) target = $region28
        $region27: #{tpu_custom_call.1} parent=19 // pred_region
          %p236 = scmp.lt.s32.totalorder %s23, 3
          %s237 = scalar_select %p236, %s23, 3
          %s238 = smul.addr %s237, 4
          %s239 = smul.addr %s238, 4
          %s240 = scalar_lea.vmem %s1, %s239
        $region28: #{tpu_custom_call.1} parent=19 // pred_fallthru
          _
        // Predicated region
        $region29: #{tpu_custom_call.1} parent=19 // pred_check
          %p241 = pneg %p99
        $region30: #{tpu_custom_call.1} parent=19 // pred_check_branch
          %243 = sbr.rel (%p241) target = $region32
        $region31: #{tpu_custom_call.1} parent=19 // pred_region
          %p244 = scmp.lt.s32.totalorder %s23, 3
          %s245 = scalar_select %p244, %s23, 3
          %s246 = smul.addr %s245, 4
          %s247 = smul.addr %s246, 4
          %s248 = scalar_lea.vmem %s2, %s247
        $region32: #{tpu_custom_call.1} parent=19 // pred_fallthru
          _
        // Predicated region
        $region33: #{tpu_custom_call.1} parent=19 // pred_check
          %p249 = pneg %p125
        $region34: #{tpu_custom_call.1} parent=19 // pred_check_branch
          %251 = sbr.rel (%p249) target = $region36
        $region35: #{tpu_custom_call.1} parent=19 // pred_region
          %p252 = scmp.lt.s32.totalorder %s23, 3
          %s253 = scalar_select %p252, %s23, 3
          %s254 = smul.addr %s253, 4
          %s255 = smul.addr %s254, 4
          %s256 = scalar_lea.vmem %s3, %s255
        $region36: #{tpu_custom_call.1} parent=19 // pred_fallthru
          _
        // Predicated region
        $region37: #{tpu_custom_call.1} parent=19 // pred_check
          %p257 = pneg %p151
        $region38: #{tpu_custom_call.1} parent=19 // pred_check_branch
          %259 = sbr.rel (%p257) target = $region40
        $region39: #{tpu_custom_call.1} parent=19 // pred_region
          %p260 = scmp.lt.s32.totalorder %s23, 3
          %s261 = scalar_select %p260, %s23, 3
          %s262 = smul.addr %s261, 4
          %s263 = scalar_lea.vmem %s4, %s262
        $region40: #{tpu_custom_call.1} parent=19 // pred_fallthru
          _
      $region20: #{tpu_custom_call.1} parent=5 // pred_fallthru
        _
      %p264 = scmp.le.s32.totalorder 1, %s15
      %p265 = scmp.lt.s32.totalorder %s15, 9
      %p266 = pnand %p264, %p265
      %p267 = pneg %p266
      // Predicated region
      $region41: #{tpu_custom_call.1} parent=5 // pred_check
        _
      $region42: #{tpu_custom_call.1} parent=5 // pred_check_branch
        %269 = sbr.rel (%p266) target = $region44
      $region43: #{tpu_custom_call.1} parent=5 // pred_region
        %s270 = ssub.s32 %s15, 1
        %p271 = scmp.lt.s32.totalorder %s24, 1
        %s272 = scalar_select %p271, %s24, 1
        %s273 = smul.addr %s272, 4
        %s274 = scalar_lea.vmem %s0, %s273
        %p275 = pneg %p53
        %p276 = pneg %p50
        %p277 = scmp.lt.s32.totalorder %s25, 3
        %s278 = scalar_select %p277, %s25, 3
        %s279 = smul.addr %s278, 4
        %s280 = smul.addr %s279, 4
        %s281 = scalar_lea.vmem %s1, %s280
        %p282 = pneg %p79
        %p283 = pneg %p76
        %p284 = scmp.lt.s32.totalorder %s25, 3
        %s285 = scalar_select %p284, %s25, 3
        %s286 = smul.addr %s285, 4
        %s287 = smul.addr %s286, 4
        %s288 = scalar_lea.vmem %s2, %s287
        %p289 = pneg %p105
        %p290 = pneg %p102
        %p291 = scmp.lt.s32.totalorder %s25, 3
        %s292 = scalar_select %p291, %s25, 3
        %s293 = smul.addr %s292, 4
        %s294 = smul.addr %s293, 4
        %s295 = scalar_lea.vmem %s3, %s294
        %p296 = pneg %p131
        %p297 = pneg %p128
        %p298 = scmp.lt.s32.totalorder %s25, 3
        %s299 = scalar_select %p298, %s25, 3
        %s300 = smul.addr %s299, 4
        %s301 = scalar_lea.vmem %s4, %s300
        %p302 = pneg %p157
        %p303 = pneg %p154
        %p304 = pneg %p178
        %p305 = pneg %p175
        %p306 = pneg %p204
        %p307 = pneg %p201
        %s308 = sand.u32 %s191, 1
        %s309 = scalar_lea.sflag [#allocation4], %s308
        %s310 = sand.u32 %s191, 1
        %s311 = smul.addr %s310, 8
        %s312 = scalar_lea.vmem [#allocation3], %s311
        %p313 = scmp.lt.s32.totalorder %s24, 1
        %s314 = scalar_select %p313, %s24, 1
        %s315 = smul.addr %s314, 4
        %s316 = scalar_lea.vmem %s0, %s315
        %p317 = scmp.lt.s32.totalorder %s25, 3
        %s318 = scalar_select %p317, %s25, 3
        %s319 = smul.addr %s318, 4
        %s320 = smul.addr %s319, 4
        %s321 = scalar_lea.vmem %s1, %s320
        %p322 = scmp.lt.s32.totalorder %s25, 3
        %s323 = scalar_select %p322, %s25, 3
        %s324 = smul.addr %s323, 4
        %s325 = smul.addr %s324, 4
        %s326 = scalar_lea.vmem %s2, %s325
        %p327 = scmp.lt.s32.totalorder %s25, 3
        %s328 = scalar_select %p327, %s25, 3
        %s329 = smul.addr %s328, 4
        %s330 = smul.addr %s329, 4
        %s331 = scalar_lea.vmem %s3, %s330
        %p332 = scmp.lt.s32.totalorder %s25, 3
        %s333 = scalar_select %p332, %s25, 3
        %s334 = smul.addr %s333, 4
        %s335 = scalar_lea.vmem %s4, %s334
        %p337 = scmp.eq.s32.totalorder %s25, 0
        // Predicated region
        $region45: #{tpu_custom_call.1} parent=43 // pred_check
          %p338 = pneg %p337
        $region46: #{tpu_custom_call.1} parent=43 // pred_check_branch
          %340 = sbr.rel (%p338) target = $region48
        $region47: #{tpu_custom_call.1} parent=43 // pred_region
          %vm341 = vcmask 261120
          %342 = vst.msk [vmem:[#allocation2] sm:$0xff] %vm341, 0.0
        $region48: #{tpu_custom_call.1} parent=43 // pred_fallthru
          _
        %v343 = vld [vmem:[%s316] sm:$0xf]
        %v344 = vld [vmem:[%s321] sm:$0xf]
        %v345 = vld [vmem:[%s321 + $0x4] sm:$0xf]
        %v346 = vld [vmem:[%s321 + $0x8] sm:$0xf]
        %v347 = vld [vmem:[%s321 + $0xc] sm:$0xf]
        %v352 = vunpack.c.l.b16 %v344
        %v353 = vunpack.c.l.b16 %v345
        %v354 = vunpack.c.l.b16 %v346
        %v355 = vunpack.c.l.b16 %v347
        %v356 = vpack.c.b16 %v353, %v352
        %v357 = vpack.c.b16 %v355, %v354
        %vm360 = vcmask 261120
        %v362 = vsel %vm360, %v343, 0
        %364 = vmatpush.bf16.msra.mxu0 0
        %365 = vmatpush.bf16.msra.mxu0 0
        %366 = vmatpush.bf16.msra.mxu0 0
        %367 = vmatpush.bf16.msra.mxu0 0
        %368 = vmatpush.bf16.msra.mxu0 0
        %369 = vmatpush.bf16.msra.mxu0 0
        %370 = vmatpush.bf16.msra.mxu0 %v357
        %371 = vmatpush.bf16.msra.mxu0 %v356
        %372 = vmatmul.bf16.gmra.mxu0 %v362
        %v373 = vpop.f32.mrf.mxu0
        %v374 = vadd.f32 0.0, %v373
        %v375 = vpop.f32.mrf.mxu0
        %376 = vdwg.mxu0
        %v377 = vld [vmem:[%s326] sm:$0xf]
        %v378 = vld [vmem:[%s326 + $0x4] sm:$0xf]
        %v379 = vld [vmem:[%s326 + $0x8] sm:$0xf]
        %v380 = vld [vmem:[%s326 + $0xc] sm:$0xf]
        %v385 = vunpack.c.l.b16 %v377
        %v386 = vunpack.c.l.b16 %v378
        %v387 = vunpack.c.l.b16 %v379
        %v388 = vunpack.c.l.b16 %v380
        %v389 = vpack.c.b16 %v386, %v385
        %v390 = vpack.c.b16 %v388, %v387
        %393 = vmatpush.bf16.msra.mxu0 0
        %394 = vmatpush.bf16.msra.mxu0 0
        %395 = vmatpush.bf16.msra.mxu0 0
        %396 = vmatpush.bf16.msra.mxu0 0
        %397 = vmatpush.bf16.msra.mxu0 0
        %398 = vmatpush.bf16.msra.mxu0 0
        %399 = vmatpush.bf16.msra.mxu0 %v390
        %400 = vmatpush.bf16.msra.mxu0 %v389
        %401 = vmatmul.bf16.gmra.mxu0 %v362
        %v402 = vpop.f32.mrf.mxu0
        %v403 = vadd.f32 0.0, %v402
        %v404 = vpop.f32.mrf.mxu0
        %405 = vdwg.mxu0
        %v406 = vld [vmem:[%s331] sm:$0xf]
        %v407 = vld [vmem:[%s331 + $0x4] sm:$0xf]
        %v408 = vld [vmem:[%s331 + $0x8] sm:$0xf]
        %v409 = vld [vmem:[%s331 + $0xc] sm:$0xf]
        %v414 = vunpack.c.l.b16 %v406
        %v415 = vunpack.c.l.b16 %v407
        %v416 = vunpack.c.l.b16 %v408
        %v417 = vunpack.c.l.b16 %v409
        %v418 = vpack.c.b16 %v415, %v414
        %v419 = vpack.c.b16 %v417, %v416
        %422 = vmatpush.bf16.msra.mxu0 0
        %423 = vmatpush.bf16.msra.mxu0 0
        %424 = vmatpush.bf16.msra.mxu0 0
        %425 = vmatpush.bf16.msra.mxu0 0
        %426 = vmatpush.bf16.msra.mxu0 0
        %427 = vmatpush.bf16.msra.mxu0 0
        %428 = vmatpush.bf16.msra.mxu0 %v419
        %429 = vmatpush.bf16.msra.mxu0 %v418
        %430 = vmatmul.bf16.gmra.mxu0 %v362
        %v431 = vpop.f32.mrf.mxu0
        %v432 = vadd.f32 0.0, %v431
        %v433 = vpop.f32.mrf.mxu0
        %434 = vdwg.mxu0
        %v435 = vpack.c.bf16 %v374, %v374
        %v436 = vpack.c.bf16 %v403, %v403
        %vm437 = vcmask 64512
        %v439 = vsel %vm437, %v435, 0
        %v442 = vsel %vm437, %v436, 0
        %444 = vmatpush.bf16.xpose.msra.mxu0 0
        %445 = vmatpush.bf16.xpose.msra.mxu0 0
        %446 = vmatpush.bf16.xpose.msra.mxu0 0
        %447 = vmatpush.bf16.xpose.msra.mxu0 0
        %448 = vmatpush.bf16.xpose.msra.mxu0 0
        %449 = vmatpush.bf16.xpose.msra.mxu0 0
        %450 = vmatpush.bf16.xpose.msra.mxu0 0
        %451 = vmatpush.bf16.xpose.msra.mxu0 %v442
        %452 = vmatmul.bf16.gmra.mxu0 %v439
        %v453 = vpop.f32.mrf.mxu0
        %v454 = vadd.f32 0.0, %v453
        %v455 = vpop.f32.mrf.mxu0
        %456 = vdwg.mxu0
        %v457 = vlaneseq
        %v458 = vshrl.u32 %v457, 7
        %v459 = vlaneseq
        %v460 = vand.u32 %v459, 127
        %vm461 = vcmp.le.s32.totalorder %v460, %v458
        %v462 = vsel %vm461, %v454, -inf
        %v463 = vsel %vm437, %v462, -inf
        %464 = vmax.xlane.f32.xlu0 %v463
        %v465 = vpop.xlane.xlu0 %464
        %v466 = vsub.f32 %v462, %v465
        %v467 = vmul.f32 %v466, 1.442695
        %v468 = vpow.pop %v467
        %v469 = vsel %vm437, %v468, 0.0
        %470 = vadd.xlane.f32.xlu0 %v469
        %v471 = vpop.xlane.xlu0 %470
        %v472 = vrcp.pop %v471
        %v473 = vmul.f32 %v468, %v472
        %v474 = vpack.c.bf16 %v473, %v473
        %v475 = vpack.c.bf16 %v432, %v432
        %v477 = vsel %vm437, %v474, 0
        %vm479 = vcmask 1043456
        %v481 = vsel %vm479, %v475, 0
        %483 = vmatpush.bf16.msra.mxu0 0
        %484 = vmatpush.bf16.msra.mxu0 0
        %485 = vmatpush.bf16.msra.mxu0 0
        %486 = vmatpush.bf16.msra.mxu0 0
        %487 = vmatpush.bf16.msra.mxu0 0
        %488 = vmatpush.bf16.msra.mxu0 0
        %489 = vmatpush.bf16.msra.mxu0 0
        %490 = vmatpush.bf16.msra.mxu0 %v481
        %491 = vmatmul.bf16.gmra.mxu0 %v477
        %v492 = vpop.f32.mrf.mxu0
        %v493 = vadd.f32 0.0, %v492
        %v494 = vpop.f32.mrf.mxu0
        %495 = vdwg.mxu0
        %v496 = vld [vmem:[#allocation2] sm:$0xff]
        %v497 = vpack.c.bf16 %v493, %v493
        %v498 = vld [vmem:[%s335] sm:$0xf]
        %v500 = vsel %vm437, %v497, 0
        %v503 = vsel %vm479, %v498, 0
        %505 = vmatpush.bf16.msra.mxu0 0
        %506 = vmatpush.bf16.msra.mxu0 0
        %507 = vmatpush.bf16.msra.mxu0 0
        %508 = vmatpush.bf16.msra.mxu0 0
        %509 = vmatpush.bf16.msra.mxu0 0
        %510 = vmatpush.bf16.msra.mxu0 0
        %511 = vmatpush.bf16.msra.mxu0 0
        %512 = vmatpush.bf16.msra.mxu0 %v503
        %513 = vmatmul.bf16.gmra.mxu0 %v500
        %v514 = vpop.f32.mrf.mxu0
        %v515 = vadd.f32 0.0, %v514
        %v516 = vpop.f32.mrf.mxu0
        %517 = vdwg.mxu0
        %v518 = vadd.f32 %v496, %v515
        %519 = vst.msk [vmem:[#allocation2] sm:$0xff] %vm360, %v518
        %p520 = scmp.eq.s32.totalorder %s25, 3
        // Predicated region
        $region49: #{tpu_custom_call.1} parent=43 // pred_check
          %p521 = pneg %p520
        $region50: #{tpu_custom_call.1} parent=43 // pred_check_branch
          %523 = sbr.rel (%p521) target = $region52
        $region51: #{tpu_custom_call.1} parent=43 // pred_region
          %v524 = vld [vmem:[#allocation2] sm:$0xff]
          %v525 = vld [vmem:[%s5] sm:$0x1]
          %v527 = vperm.slane %v525, 0
          %v529 = vadd.f32 %v524, %v527
          %530 = vst.msk [vmem:[%s312] sm:$0xff] %vm360, %v529
        $region52: #{tpu_custom_call.1} parent=43 // pred_fallthru
          _
        %s531 = sand.u32 %s191, 1
        %s532 = scalar_lea.sflag [#allocation4], %s531
        %s533 = sand.u32 %s191, 1
        %s534 = smul.addr %s533, 8
        %s535 = scalar_lea.vmem [#allocation3], %s534
        // Predicated region
        $region53: #{tpu_custom_call.1} parent=43 // pred_check
          %p536 = pneg %p201
        $region54: #{tpu_custom_call.1} parent=43 // pred_check_branch
          %538 = sbr.rel (%p536) target = $region56
        $region55: #{tpu_custom_call.1} parent=43 // pred_region
          %540 = vsyncadd %s532, 0
          %s541 = smul.addr %s24, 8
          %s542 = scalar_lea.hbm %s6, %s541
          %s544 = sshll.u32 %s535, 4
          %s545 = int_to_ptr.vmem [resolvable:$true] %s544
          %s546 = sshll.u32 %s542, 4
          %s547 = int_to_ptr.hbm [resolvable:$true] %s546
          %549 = dma.vmem_to_hbm [thread:$0]  %s545, 128, %s547, %s532
        $region56: #{tpu_custom_call.1} parent=43 // pred_fallthru
          _
      $region44: #{tpu_custom_call.1} parent=5 // pred_fallthru
        _
      %p550 = scmp.le.s32.totalorder 2, %s15
      // Predicated region
      $region57: #{tpu_custom_call.1} parent=5 // pred_check
        %p551 = pneg %p550
      $region58: #{tpu_custom_call.1} parent=5 // pred_check_branch
        %553 = sbr.rel (%p551) target = $region60
      $region59: #{tpu_custom_call.1} parent=5 // pred_region
        %s554 = ssub.s32 %s15, 2
        // Predicated region
        $region61: #{tpu_custom_call.1} parent=59 // pred_check
          %p555 = pneg %p207
        $region62: #{tpu_custom_call.1} parent=59 // pred_check_branch
          %557 = sbr.rel (%p555) target = $region64
        $region63: #{tpu_custom_call.1} parent=59 // pred_region
          %s558 = sand.u32 %s192, 1
          %s559 = scalar_lea.sflag [#allocation4], %s558
          %s560 = sand.u32 %s192, 1
          %s561 = smul.addr %s560, 8
          %s562 = scalar_lea.vmem [#allocation3], %s561
          %564 = dma.done %s559, 128
        $region64: #{tpu_custom_call.1} parent=59 // pred_fallthru
          _
      $region60: #{tpu_custom_call.1} parent=5 // pred_fallthru
        _
    $region6: #{tpu_custom_call.1} parent=1 // loop_footer
      %s19 = sadd.s32 1, %s15
    $region7: #{tpu_custom_call.1} parent=1 // loop_footer_branch
      %14 = sbr.rel target = $region3
    $region8: #{tpu_custom_call.1} parent=1 // loop_exit
      _
    %565 = vsyncpa [#allocation4], 1
    %s566 = scalar_lea.sflag [#allocation4], 1
    %567 = vsyncpa %s566, 1

</llo_original>
